<compile_context>
chip_gen: v7x
topology: tpu7x:2x2x1
jax: 0.10.0
libtpu: 0.0.40
codegen_flags: <defaults>
</compile_context>

<pallas_src>
import jax
import jax.numpy as jnp
from jax.experimental import pallas as pl
from jax.experimental.pallas import tpu as pltpu

_LANE_CHOICES = (1024, 512, 256, 128)     # lane-dense widths, multiples of 128
_MAX_TILE_BYTES = 4 * 1024 * 1024         # 4 MiB per tile; in+out double-buffered = 16 MiB
_VMEM_LIMIT_BYTES = 32 * 1024 * 1024


def _identity_encode_kernel(x_ref, o_ref):
    # The base class defines no transform beyond images -> features;
    # elementwise pass over the (tile_rows, lane) block.
    o_ref[...] = x_ref[...]


def _round_up(x: int, m: int) -> int:
    return -(-x // m) * m


def _sublane_multiple(dtype) -> int:
    # Native sublane packing: 8 rows for 4-byte dtypes, 16 for 2-byte,
    # 32 for 1-byte (sub-32-bit dtypes pack along sublanes).
    return max(8, 32 // jnp.dtype(dtype).itemsize)


def _base_image_encode_impl(images: jnp.ndarray) -> jnp.ndarray:
    orig_shape = images.shape
    dtype = images.dtype
    itemsize = jnp.dtype(dtype).itemsize
    total = images.size
    sub = _sublane_multiple(dtype)

    # Largest lane width that evenly divides the element count -> no pad, no
    # post-kernel slice (each of those is a full-tensor HBM round trip).
    lane = next((l for l in _LANE_CHOICES if total % l == 0), None)

    padded_total = total
    if lane is None:
        # Rare fallback: element count not 128-divisible -> minimal pad.
        lane = 128
        padded_total = _round_up(total, lane)

    rows = padded_total // lane

    # Sublane-aligned row tile, capped by the per-tile VMEM budget.
    budget_rows = max(sub, (_MAX_TILE_BYTES // (lane * itemsize)) // sub * sub)
    tile_rows = min(budget_rows, _round_up(rows, sub))

    flat = images.reshape(-1)
    if padded_total != total:
        flat = jnp.pad(flat, (0, padded_total - total))
    slab = flat.reshape(rows, lane)

    # Ragged last row-block (rows % tile_rows != 0, or tile_rows > rows) is
    # masked by Pallas; no wrapper-side row padding.
    grid = (pl.cdiv(rows, tile_rows),)

    out_slab = pl.pallas_call(
        _identity_encode_kernel,
        out_shape=jax.ShapeDtypeStruct(slab.shape, slab.dtype),
        grid_spec=pltpu.PrefetchScalarGridSpec(
            num_scalar_prefetch=0,
            grid=grid,
            in_specs=[pl.BlockSpec((tile_rows, lane), lambda i: (i, 0))],
            out_specs=pl.BlockSpec((tile_rows, lane), lambda i: (i, 0)),
        ),
        compiler_params=pltpu.CompilerParams(
            dimension_semantics=("parallel",),
            vmem_limit_bytes=_VMEM_LIMIT_BYTES,
        ),
    )(slab)

    out_flat = out_slab.reshape(-1)
    if padded_total != total:
        out_flat = out_flat[:total]
    return out_flat.reshape(orig_shape)


# Jit the wrapper so the reshaped slab is an intermediate buffer and the
# reshape/flatten stays layout plumbing rather than materialized copies.
base_image_encode = jax.jit(_base_image_encode_impl)


if __name__ == "__main__":
    key = jax.random.PRNGKey(0)
    # Small NCHW image batch consistent with the module interface.
    images = jax.random.normal(key, (2, 4, 16, 16), dtype=jnp.float32)

    features = base_image_encode(images)
    jax.block_until_ready(features)

    # Sanity: identity semantics (base class defines no transform of its own).
    assert features.shape == images.shape
    assert jnp.allclose(features, images)

    print("KERNEL_OK")
</pallas_src>

<mosaic_0001>
module attributes {stable_mosaic.version = 11 : i64} {
  func.func @_identity_encode_kernel(%arg0: i32, %arg1: memref<8x1024xf32, #tpu.memory_space<vmem>>, %arg2: memref<8x1024xf32, #tpu.memory_space<vmem>>) attributes {dimension_semantics = [#tpu.dimension_semantics<parallel>], iteration_bounds = array<i64: 1>, scalar_prefetch = 0 : i64, scratch_operands = 0 : i64, tpu.core_type = #tpu.core_type<tc>, window_params = [{transform_indices = @transform_0, window_bounds = array<i64: 8, 1024>}, {transform_indices = @transform_1, window_bounds = array<i64: 8, 1024>}]} {
    %c0 = arith.constant 0 : index
    %c0_0 = arith.constant 0 : index
    %0 = vector.load %arg1[%c0, %c0_0] : memref<8x1024xf32, #tpu.memory_space<vmem>>, vector<8x1024xf32>
    %c0_1 = arith.constant 0 : index
    %c0_2 = arith.constant 0 : index
    %1 = vector.load %arg2[%c0_1, %c0_2] : memref<8x1024xf32, #tpu.memory_space<vmem>>, vector<8x1024xf32>
    tpu.vector_store %arg2[%c0_1, %c0_2], %0 {strides = array<i32>} : memref<8x1024xf32, #tpu.memory_space<vmem>>, vector<8x1024xf32>,
    return
  }
  func.func @transform_0(%arg0: i32) -> (i32, i32) {
    %c0_i32 = arith.constant 0 : i32
    %c0_i32_0 = arith.constant 0 : i32
    return %arg0, %c0_i32 : i32, i32
  }
  func.func @transform_1(%arg0: i32) -> (i32, i32) {
    %c0_i32 = arith.constant 0 : i32
    %c0_i32_0 = arith.constant 0 : i32
    return %arg0, %c0_i32 : i32, i32
  }
}

</mosaic_0001>

<llo_original>
// kernel: _base_image_encode_impl.1
$region0: #{_base_image_encode_impl.1}
  #allocation0 [shape = 'u32[]', space=smem, size = 0x4, offset = 0x4, fixed_abs, tag = 'smem constant byte address 0x4 - core index']
  #allocation1 [shape = 'u32[144,128]{1,0:T(1,128)}', space=vmem, size = 0x12000, scoped, tag = 'internal scratch']
  %s0 = inlined_call_operand.vmem [shape: f32[2,1024], index: 0, kind: input, shape index: {}]
  %s1 = inlined_call_operand.vmem [shape: f32[2,1024], index: 1, kind: output, shape index: {}]
  %s2 = sld [smem:[#allocation0]]
  $region33: #{_base_image_encode_impl.1} parent=0
    _
  %s4 = ssub.s32 1, %s2
  %s5 = scalar_select 0, %s4, %s2
  $region1: #{_base_image_encode_impl.1} parent=0
    #allocation2 [shape = 'u8[32768]{0}', space=vmem, size = 0x8000, scoped, tag = 'output window, operand 0, single buffered']
    // Predicated region
    $region2: #{_base_image_encode_impl.1} parent=1 // pred_check
      _
    $region3: #{_base_image_encode_impl.1} parent=1 // pred_check_branch
      %7 = sbr.rel (0) target = $region5
    $region4: #{_base_image_encode_impl.1} parent=1 // pred_region
      _
    $region5: #{_base_image_encode_impl.1} parent=1 // pred_fallthru
      _
    %v8 = vld [vmem:[%s0] sm:$0xff]
    %v9 = vld [vmem:[%s0 + $0x8] sm:$0xff]
    %v10 = vld [vmem:[%s0 + $0x10] sm:$0xff]
    %v11 = vld [vmem:[%s0 + $0x18] sm:$0xff]
    %v12 = vld [vmem:[%s0 + $0x20] sm:$0xff]
    %v13 = vld [vmem:[%s0 + $0x28] sm:$0xff]
    %v14 = vld [vmem:[%s0 + $0x30] sm:$0xff]
    %v15 = vld [vmem:[%s0 + $0x38] sm:$0xff]
    %16 = vst [vmem:[#allocation2] sm:$0xff] %v8
    %17 = vst [vmem:[#allocation2 + $0x8] sm:$0xff] %v9
    %18 = vst [vmem:[#allocation2 + $0x10] sm:$0xff] %v10
    %19 = vst [vmem:[#allocation2 + $0x18] sm:$0xff] %v11
    %20 = vst [vmem:[#allocation2 + $0x20] sm:$0xff] %v12
    %21 = vst [vmem:[#allocation2 + $0x28] sm:$0xff] %v13
    %22 = vst [vmem:[#allocation2 + $0x30] sm:$0xff] %v14
    %23 = vst [vmem:[#allocation2 + $0x38] sm:$0xff] %v15
    // Predicated region
    $region6: #{_base_image_encode_impl.1} parent=1 // pred_check
      _
    $region7: #{_base_image_encode_impl.1} parent=1 // pred_check_branch
      %25 = sbr.rel (0) target = $region9
    $region8: #{_base_image_encode_impl.1} parent=1 // pred_region
      // Predicated region
      $region10: #{_base_image_encode_impl.1} parent=8 // pred_check
        _
      $region11: #{_base_image_encode_impl.1} parent=8 // pred_check_branch
        %27 = sbr.rel (0) target = $region13
      $region12: #{_base_image_encode_impl.1} parent=8 // pred_region
        // Predicated region
        $region14: #{_base_image_encode_impl.1} parent=12 // pred_check
          _
        $region15: #{_base_image_encode_impl.1} parent=12 // pred_check_branch
          %29 = sbr.rel (0) target = $region17
        $region16: #{_base_image_encode_impl.1} parent=12 // pred_region
          loop: start=0, step=1, limit=1
          $region18: #{_base_image_encode_impl.1} parent=16 // loop_pre_header
            _
          $region19: #{_base_image_encode_impl.1} parent=16 // loop_header
            %s31 = sphi 0, %s35
            %p32 = scmp.ge.s32.totalorder %s31, 1
            %s36 = sphi [#allocation2], [#allocation2]
            %s37 = sphi %s1, %s1
          $region20: #{_base_image_encode_impl.1} parent=16 // loop_header_branch
            %34 = sbr.rel (%p32) target = $region24
          $region21: #{_base_image_encode_impl.1} parent=16 // loop_body
            %v38 = vld [vmem:[%s36] sm:$0xff]
            %39 = vst [vmem:[%s37] sm:$0xff] %v38
            %v40 = vld [vmem:[%s36 + $0x8] sm:$0xff]
            %41 = vst [vmem:[%s37 + $0x8] sm:$0xff] %v40
          $region22: #{_base_image_encode_impl.1} parent=16 // loop_footer
            %s35 = sadd.s32 1, %s31
          $region23: #{_base_image_encode_impl.1} parent=16 // loop_footer_branch
            %30 = sbr.rel target = $region19
          $region24: #{_base_image_encode_impl.1} parent=16 // loop_exit
            _
        $region17: #{_base_image_encode_impl.1} parent=12 // pred_fallthru
          _
        // Predicated region
        $region25: #{_base_image_encode_impl.1} parent=12 // pred_check
          _
        $region26: #{_base_image_encode_impl.1} parent=12 // pred_check_branch
          %43 = sbr.rel target = $region28
        $region27: #{_base_image_encode_impl.1} parent=12 // pred_region
          _
        $region28: #{_base_image_encode_impl.1} parent=12 // pred_fallthru
          _
      $region13: #{_base_image_encode_impl.1} parent=8 // pred_fallthru
        _
      %44 = vnop
    $region9: #{_base_image_encode_impl.1} parent=1 // pred_fallthru
      _
    // Predicated region
    $region29: #{_base_image_encode_impl.1} parent=1 // pred_check
      _
    $region30: #{_base_image_encode_impl.1} parent=1 // pred_check_branch
      %46 = sbr.rel (0) target = $region32
    $region31: #{_base_image_encode_impl.1} parent=1 // pred_region
      _
    $region32: #{_base_image_encode_impl.1} parent=1 // pred_fallthru
      _

</llo_original>
